<compile_context>
chip_gen: v7x
topology: tpu7x:2x2x1
jax: 0.10.0
libtpu: 0.0.40
codegen_flags: <defaults>
</compile_context>

<pallas_src>
import functools

import numpy as np
import jax
import jax.numpy as jnp
from jax.experimental import pallas as pl
from jax.experimental.pallas import tpu as pltpu

_MIB = 1024 * 1024


def _round_up(x: int, m: int) -> int:
    return (x + m - 1) // m * m


def _vmem_ceiling_bytes() -> int:
    """Per-generation scoped-VMEM ceiling we allow ourselves (with headroom)."""
    try:
        kind = jax.devices()[0].device_kind.lower()
    except Exception:
        kind = ""
    # v5e/v5p/v6e: 128 MiB VMEM per TensorCore -> ~104 MiB usable.
    # v7x (and unknown): 64 MiB -> ~52 MiB usable (leave compiler headroom).
    if any(tag in kind for tag in ("v5", "v6", "trillium")):
        return 104 * _MIB
    return 52 * _MIB


def _choose_tiles(n: int, tm: int | None, tk: int | None):
    """Pick (tm, tk, n_pad).  Big tiles by default; keep >=2 row tiles so the
    'parallel' axis can shard across both v7x TensorCores."""
    n128 = _round_up(n, 128)
    tk = 512 if tk is None else tk
    tm = 256 if tm is None else tm
    assert tk % 128 == 0 and tm % 128 == 0
    tk = min(tk, n128)
    tm = min(tm, n128)
    n_pad = _round_up(n128, tk)
    while n_pad % tm != 0:
        tm -= 128
    while tm > 128 and n_pad // tm < 2:
        tm //= 2
    return tm, tk, n_pad


def prepare_graph(adj, *, tm: int | None = None, tk: int | None = None):
    """One-time, per-graph preprocessing.  Cache and reuse the result across
    forward calls: the row-normalize + pad + bf16 cast of A costs more HBM
    traffic than one layer's A streaming, and the block-sparsity tables depend
    only on the graph and tile sizes."""
    n = adj.shape[0]
    assert adj.shape == (n, n)
    tm, tk, n_pad = _choose_tiles(n, tm, tk)

    adj = jnp.asarray(adj, jnp.float32)
    # Mean over incoming edges.  max(deg, 1) guards in-degree-0 nodes: their
    # A_hat row is zero, so output = 0 + residual = h, matching DGL's behaviour
    # of leaving nodes with an empty mailbox unchanged.
    deg = jnp.sum(adj, axis=1, keepdims=True)
    a_hat = adj / jnp.maximum(deg, 1.0)
    a_pad = jnp.pad(a_hat, ((0, n_pad - n), (0, n_pad - n)))

    # Block-sparsity tables for scalar prefetch: for every row tile, the list
    # of k-blocks containing at least one edge, plus the count.
    n_rows, n_cols = n_pad // tm, n_pad // tk
    nz = np.asarray(
        jnp.any(a_pad.reshape(n_rows, tm, n_cols, tk) != 0.0, axis=(1, 3)))
    cnt = nz.sum(axis=1).astype(np.int32)
    max_blocks = max(int(cnt.max()), 1)
    ids = np.zeros((n_rows, max_blocks), np.int32)
    for r in range(n_rows):
        cols = np.flatnonzero(nz[r])
        ids[r, :cols.size] = cols
        if 0 < cols.size < max_blocks:
            ids[r, cols.size:] = cols[-1]  # repeat last valid id -> no extra DMA

    return {
        "a": a_pad.astype(jnp.bfloat16),          # padded, row-normalized, bf16
        "ids": jnp.asarray(ids.reshape(-1)),      # flat int32 (compact SMEM)
        "cnt": jnp.asarray(cnt),                  # int32 [n_rows]
        "nnz_blocks": int(cnt.sum()),
        "tm": tm, "tk": tk, "n": n, "n_pad": n_pad, "max_blocks": max_blocks,
    }


def _gcn_layer_kernel(ids_ref, cnt_ref, a_ref, h_ref, hi_ref, wt_ref, o_ref,
                      acc_ref, *, apply_relu: bool, h_resident: bool,
                      tk: int, max_blocks: int):
    # ids_ref/cnt_ref: SMEM block tables (scalar prefetch)
    # a_ref : [tm, tk]            bf16  A_hat block (i, ids[i, j])
    # h_ref : [n_pad, f] or [tk, f] bf16  source features (resident / streamed)
    # hi_ref: [tm, f]             bf16  destination features (residual)
    # wt_ref: [f, f]              bf16  W^T (Linear bias=False: y = h @ W^T)
    # o_ref : [tm, f]             bf16  output row tile
    # acc_ref: [tm, f]            f32   aggregation accumulator (VMEM scratch)
    i = pl.program_id(0)
    j = pl.program_id(1)

    @pl.when(j == 0)
    def _():
        acc_ref[...] = jnp.zeros_like(acc_ref)

    @pl.when(j < cnt_ref[i])          # skip all-zero A blocks entirely
    def _():
        if h_resident:
            off = pl.multiple_of(ids_ref[i * max_blocks + j] * tk, tk)
            hk = h_ref[pl.ds(off, tk), :]
        else:
            hk = h_ref[...]
        acc_ref[...] += jnp.dot(a_ref[...], hk,
                                preferred_element_type=jnp.float32)

    @pl.when(j == pl.num_programs(1) - 1)
    def _():
        # Project once per row tile: (A_hat @ H) @ W^T == A_hat @ (H @ W^T).
        agg = acc_ref[...].astype(jnp.bfloat16)
        y = jnp.dot(agg, wt_ref[...], preferred_element_type=jnp.float32)
        y = y + hi_ref[...].astype(jnp.float32)          # residual
        if apply_relu:
            y = jnp.maximum(y, 0.0)
        o_ref[...] = y.astype(o_ref.dtype)


def gcn_layer(graph, h, wt, *, apply_relu: bool, h_resident: bool):
    tm, tk = graph["tm"], graph["tk"]
    n_pad, max_blocks = graph["n_pad"], graph["max_blocks"]
    n_pad_h, f = h.shape
    assert n_pad_h == n_pad and f % 128 == 0
    assert wt.shape == (f, f), "layer is reused -> in_feats must equal out_feats"

    # VMEM footprint (2x double-buffered bf16 operands + f32 accumulator).
    h_buf = (n_pad * f) if h_resident else (tk * f)
    vmem_bytes = 2 * 2 * (tm * tk + h_buf + tm * f + f * f + tm * f) + 4 * tm * f
    compiler_kwargs = dict(dimension_semantics=("parallel", "arbitrary"))
    if vmem_bytes > 12 * _MIB:
        compiler_kwargs["vmem_limit_bytes"] = int(
            min(vmem_bytes + 8 * _MIB, _vmem_ceiling_bytes()))

    # Advisory cost estimate so XLA overlaps surrounding pad/cast/slice ops.
    nnz = max(graph["nnz_blocks"], 1)
    flops = 2 * nnz * tm * tk * f + 2 * n_pad * f * f
    h_bytes = n_pad * f * 2 if h_resident else nnz * tk * f * 2
    bytes_accessed = (nnz * tm * tk * 2 + h_bytes + n_pad * f * 2 +
                      f * f * 2 + n_pad * f * 2)
    cost = pl.CostEstimate(flops=flops, transcendentals=0,
                           bytes_accessed=bytes_accessed)

    if h_resident:
        # Whole H resident in VMEM (constant index -> DMA'd once), sliced in-kernel.
        h_spec = pl.BlockSpec((n_pad, f), lambda i, j, ids, cnt: (0, 0))
    else:
        # Stream only the K-slices belonging to non-zero A blocks.
        h_spec = pl.BlockSpec(
            (tk, f), lambda i, j, ids, cnt: (ids[i * max_blocks + j], 0))

    kernel = functools.partial(_gcn_layer_kernel, apply_relu=apply_relu,
                               h_resident=h_resident, tk=tk,
                               max_blocks=max_blocks)
    return pl.pallas_call(
        kernel,
        out_shape=jax.ShapeDtypeStruct((n_pad, f), h.dtype),
        grid_spec=pltpu.PrefetchScalarGridSpec(
            num_scalar_prefetch=2,
            grid=(n_pad // tm, max_blocks),
            in_specs=[
                # A_hat block, data-dependent k-block index (skips zero blocks).
                pl.BlockSpec((tm, tk),
                             lambda i, j, ids, cnt: (i, ids[i * max_blocks + j])),
                h_spec,                                               # H (source rows)
                pl.BlockSpec((tm, f), lambda i, j, ids, cnt: (i, 0)),  # H (dest/residual)
                pl.BlockSpec((f, f), lambda i, j, ids, cnt: (0, 0)),   # W^T (resident)
            ],
            out_specs=pl.BlockSpec((tm, f), lambda i, j, ids, cnt: (i, 0)),
            scratch_shapes=[pltpu.VMEM((tm, f), jnp.float32)],
        ),
        compiler_params=pltpu.CompilerParams(**compiler_kwargs),
        cost_estimate=cost,
    )(graph["ids"], graph["cnt"], graph["a"], h, h, wt)


def gcn_net(graph, x, wt, *, h_resident: bool | None = None):
    """GCNNet.forward: x = relu(layer1(g, x)); x = layer1(g, x)."""
    n, f = x.shape
    assert n == graph["n"]
    n_pad = graph["n_pad"]
    f_pad = _round_up(f, 128)

    # Zero-pad features to lane-dense tiles, cast to bf16 for the MXU.  Zero
    # padding keeps semantics exact (padded rows/cols contribute nothing).
    x_p = jnp.pad(x, ((0, n_pad - n), (0, f_pad - f))).astype(jnp.bfloat16)
    wt_p = jnp.pad(wt, ((0, f_pad - f), (0, f_pad - f))).astype(jnp.bfloat16)

    if h_resident is None:
        budget = min(16 * _MIB, _vmem_ceiling_bytes() // 4)
        h_resident = 2 * n_pad * f_pad * 2 <= budget   # double-buffered worst case

    # NOTE: the intermediate activation is kept in bf16 (halves inter-layer HBM
    # traffic); use f32 out_shape if tighter accuracy is needed.
    x1 = gcn_layer(graph, x_p, wt_p, apply_relu=True, h_resident=h_resident)
    out = gcn_layer(graph, x1, wt_p, apply_relu=False, h_resident=h_resident)
    return out[:n, :f].astype(jnp.float32)


def _reference(a_hat, x, wt):
    def layer(h):
        return a_hat @ (h @ wt) + h
    return layer(jnp.maximum(layer(x), 0.0))


if __name__ == "__main__":
    # Small shapes consistent with the module (in_feats == out_feats so the
    # single layer can be reused).  Non-aligned to exercise the padding path
    # (real module: N nodes x 400 feats -> padded to 512).
    N, F = 200, 120

    key = jax.random.PRNGKey(0)
    k_x, k_w = jax.random.split(key)
    x = jax.random.normal(k_x, (N, F), dtype=jnp.float32)
    # rel_W: nn.Linear(F, F, bias=False) -> weight [out, in]; kernel uses W^T.
    w = jax.random.normal(k_w, (F, F), dtype=jnp.float32) * (1.0 / jnp.sqrt(F))
    wt = w.T

    # Deterministic directed graph with block-sparse structure + one isolated
    # node (in-degree 0) to exercise the degree guard and the block-skip path.
    adj_np = np.zeros((N, N), np.float32)
    for i in range(0, 128):
        adj_np[i, (i - 1) % N] = 1.0          # rows 0..127 pull from blocks {0,1}
    for i in range(128, N - 1):
        adj_np[i, i + 1] = 1.0                # rows 128..198 pull from block 1 only
    adj_np[N - 1, 128] = 1.0
    adj_np[50, :] = 0.0                        # node 50: empty mailbox -> h unchanged
    adj = jnp.asarray(adj_np)

    # Reference on the same bf16-rounded inputs (f32 math) so only the kernel's
    # intermediate bf16 casts / accumulation order differ.
    a_hat = adj / jnp.maximum(jnp.sum(adj, axis=1, keepdims=True), 1.0)
    ref = _reference(a_hat.astype(jnp.bfloat16).astype(jnp.float32),
                     x.astype(jnp.bfloat16).astype(jnp.float32),
                     wt.astype(jnp.bfloat16).astype(jnp.float32))

    # Path 1: default (large) tiles, VMEM-resident H.
    g1 = prepare_graph(adj)
    out1 = jax.block_until_ready(gcn_net(g1, x, wt))
    assert out1.shape == (N, F)
    assert jnp.allclose(out1, ref, atol=1e-1, rtol=5e-2), "mismatch (resident H)"

    # Path 2: 128-tiles, block-sparse skipping with streamed (non-resident) H.
    g2 = prepare_graph(adj, tm=128, tk=128)
    out2 = jax.block_until_ready(gcn_net(g2, x, wt, h_resident=False))
    assert jnp.allclose(out2, ref, atol=1e-1, rtol=5e-2), "mismatch (streamed H)"

    print("KERNEL_OK")
</pallas_src>

<mosaic_0001>
module attributes {stable_mosaic.version = 11 : i64} {
  func.func @_gcn_layer_kernel(%arg0: i32, %arg1: i32, %arg2: memref<2xi32, #tpu.memory_space<smem>>, %arg3: memref<2xi32, #tpu.memory_space<smem>>, %arg4: memref<128x256xbf16, #tpu.memory_space<vmem>>, %arg5: memref<256x128xbf16, #tpu.memory_space<vmem>>, %arg6: memref<128x128xbf16, #tpu.memory_space<vmem>>, %arg7: memref<128x128xbf16, #tpu.memory_space<vmem>>, %arg8: memref<128x128xbf16, #tpu.memory_space<vmem>>, %arg9: memref<128x128xf32, #tpu.memory_space<vmem>>) attributes {dimension_semantics = [#tpu.dimension_semantics<parallel>, #tpu.dimension_semantics<arbitrary>], iteration_bounds = array<i64: 2, 1>, scalar_prefetch = 2 : i64, scratch_operands = 1 : i64, tpu.core_type = #tpu.core_type<tc>, window_params = [{transform_indices = @transform_0, window_bounds = array<i64: 128, 256>}, {pipeline_mode = #tpu.pipeline_mode<synchronous>, transform_indices = @transform_1, window_bounds = array<i64: 256, 128>}, {transform_indices = @transform_2, window_bounds = array<i64: 128, 128>}, {pipeline_mode = #tpu.pipeline_mode<synchronous>, transform_indices = @transform_3, window_bounds = array<i64: 128, 128>}, {transform_indices = @transform_4, window_bounds = array<i64: 128, 128>}]} {
    %c0_i32 = arith.constant 0 : i32
    %0 = arith.cmpi eq, %arg1, %c0_i32 : i32
    %1 = arith.extui %0 : i1 to i32
    %c0_i32_0 = arith.constant 0 : i32
    %2 = arith.cmpi ne, %1, %c0_i32_0 : i32
    scf.if %2 {
      %cst = arith.constant 0.000000e+00 : f32
      %11 = vector.broadcast %cst : f32 to vector<128x128xf32>
      %c0 = arith.constant 0 : index
      %c0_4 = arith.constant 0 : index
      %12 = vector.load %arg9[%c0, %c0_4] : memref<128x128xf32, #tpu.memory_space<vmem>>, vector<128x128xf32>
      tpu.vector_store %arg9[%c0, %c0_4], %11 {strides = array<i32>} : memref<128x128xf32, #tpu.memory_space<vmem>>, vector<128x128xf32>,
    } else {
    }
    %3 = arith.index_cast %arg0 : i32 to index
    %4 = memref.load %arg3[%3] : memref<2xi32, #tpu.memory_space<smem>>
    %5 = arith.cmpi slt, %arg1, %4 : i32
    %6 = arith.extui %5 : i1 to i32
    %c0_i32_1 = arith.constant 0 : i32
    %7 = arith.cmpi ne, %6, %c0_i32_1 : i32
    scf.if %7 {
      %c1_i32 = arith.constant 1 : i32
      %11 = arith.muli %arg0, %c1_i32 : i32
      %12 = arith.addi %11, %arg1 : i32
      %13 = arith.index_cast %12 : i32 to index
      %14 = memref.load %arg2[%13] : memref<2xi32, #tpu.memory_space<smem>>
      %c256_i32 = arith.constant 256 : i32
      %15 = arith.muli %14, %c256_i32 : i32
      %16 = tpu.assume_multiple %15, 256 : i32
      %17 = arith.index_cast %16 : i32 to index
      %c0 = arith.constant 0 : index
      %18 = vector.load %arg5[%17, %c0] : memref<256x128xbf16, #tpu.memory_space<vmem>>, vector<256x128xbf16>
      %c0_4 = arith.constant 0 : index
      %c0_5 = arith.constant 0 : index
      %19 = vector.load %arg9[%c0_4, %c0_5] : memref<128x128xf32, #tpu.memory_space<vmem>>, vector<128x128xf32>
      %c0_6 = arith.constant 0 : index
      %c0_7 = arith.constant 0 : index
      %20 = vector.load %arg4[%c0_6, %c0_7] : memref<128x256xbf16, #tpu.memory_space<vmem>>, vector<128x256xbf16>
      %cst = arith.constant dense<0.000000e+00> : vector<128x128xf32>
      %21 = tpu.matmul %20, %18, %cst {dimension_numbers = #tpu.dot_dimension_numbers<[1], [0], [0], [1], [0, 0, 1, 1], [], []>} : vector<128x256xbf16>, vector<256x128xbf16>, vector<128x128xf32> -> vector<128x128xf32>
      %22 = arith.addf %19, %21 : vector<128x128xf32>
      %c0_8 = arith.constant 0 : index
      %c0_9 = arith.constant 0 : index
      %23 = vector.load %arg9[%c0_8, %c0_9] : memref<128x128xf32, #tpu.memory_space<vmem>>, vector<128x128xf32>
      tpu.vector_store %arg9[%c0_8, %c0_9], %22 {strides = array<i32>} : memref<128x128xf32, #tpu.memory_space<vmem>>, vector<128x128xf32>,
    } else {
    }
    %c0_i32_2 = arith.constant 0 : i32
    %8 = arith.cmpi eq, %arg1, %c0_i32_2 : i32
    %9 = arith.extui %8 : i1 to i32
    %c0_i32_3 = arith.constant 0 : i32
    %10 = arith.cmpi ne, %9, %c0_i32_3 : i32
    scf.if %10 {
      %c0 = arith.constant 0 : index
      %c0_4 = arith.constant 0 : index
      %11 = vector.load %arg9[%c0, %c0_4] : memref<128x128xf32, #tpu.memory_space<vmem>>, vector<128x128xf32>
      %12 = arith.truncf %11 : vector<128x128xf32> to vector<128x128xbf16>
      %c0_5 = arith.constant 0 : index
      %c0_6 = arith.constant 0 : index
      %13 = vector.load %arg7[%c0_5, %c0_6] : memref<128x128xbf16, #tpu.memory_space<vmem>>, vector<128x128xbf16>
      %cst = arith.constant dense<0.000000e+00> : vector<128x128xf32>
      %14 = tpu.matmul %12, %13, %cst {dimension_numbers = #tpu.dot_dimension_numbers<[1], [0], [0], [1], [0, 0, 1, 1], [], []>} : vector<128x128xbf16>, vector<128x128xbf16>, vector<128x128xf32> -> vector<128x128xf32>
      %c0_7 = arith.constant 0 : index
      %c0_8 = arith.constant 0 : index
      %15 = vector.load %arg6[%c0_7, %c0_8] : memref<128x128xbf16, #tpu.memory_space<vmem>>, vector<128x128xbf16>
      %16 = arith.extf %15 : vector<128x128xbf16> to vector<128x128xf32>
      %17 = arith.addf %14, %16 : vector<128x128xf32>
      %cst_9 = arith.constant 0.000000e+00 : f32
      %18 = vector.broadcast %cst_9 : f32 to vector<128x128xf32>
      %19 = arith.maximumf %17, %18 : vector<128x128xf32>
      %20 = arith.truncf %19 : vector<128x128xf32> to vector<128x128xbf16>
      %c0_10 = arith.constant 0 : index
      %c0_11 = arith.constant 0 : index
      %21 = vector.load %arg8[%c0_10, %c0_11] : memref<128x128xbf16, #tpu.memory_space<vmem>>, vector<128x128xbf16>
      tpu.vector_store %arg8[%c0_10, %c0_11], %20 {strides = array<i32>} : memref<128x128xbf16, #tpu.memory_space<vmem>>, vector<128x128xbf16>,
    } else {
    }
    return
  }
  func.func @transform_0(%arg0: i32, %arg1: i32, %arg2: memref<2xi32, #tpu.memory_space<smem>>, %arg3: memref<2xi32, #tpu.memory_space<smem>>) -> (i32, i32) {
    %c1_i32 = arith.constant 1 : i32
    %0 = arith.muli %arg0, %c1_i32 : i32
    %1 = arith.addi %0, %arg1 : i32
    %2 = arith.index_cast %1 : i32 to index
    %3 = memref.load %arg2[%2] : memref<2xi32, #tpu.memory_space<smem>>
    %c0_i32 = arith.constant 0 : i32
    return %arg0, %3 : i32, i32
  }
  func.func @transform_1(%arg0: i32, %arg1: i32, %arg2: memref<2xi32, #tpu.memory_space<smem>>, %arg3: memref<2xi32, #tpu.memory_space<smem>>) -> (i32, i32) {
    %c0_i32 = arith.constant 0 : i32
    %c0_i32_0 = arith.constant 0 : i32
    %c0_i32_1 = arith.constant 0 : i32
    return %c0_i32, %c0_i32_0 : i32, i32
  }
  func.func @transform_2(%arg0: i32, %arg1: i32, %arg2: memref<2xi32, #tpu.memory_space<smem>>, %arg3: memref<2xi32, #tpu.memory_space<smem>>) -> (i32, i32) {
    %c0_i32 = arith.constant 0 : i32
    %c0_i32_0 = arith.constant 0 : i32
    return %arg0, %c0_i32 : i32, i32
  }
  func.func @transform_3(%arg0: i32, %arg1: i32, %arg2: memref<2xi32, #tpu.memory_space<smem>>, %arg3: memref<2xi32, #tpu.memory_space<smem>>) -> (i32, i32) {
    %c0_i32 = arith.constant 0 : i32
    %c0_i32_0 = arith.constant 0 : i32
    %c0_i32_1 = arith.constant 0 : i32
    return %c0_i32, %c0_i32_0 : i32, i32
  }
  func.func @transform_4(%arg0: i32, %arg1: i32, %arg2: memref<2xi32, #tpu.memory_space<smem>>, %arg3: memref<2xi32, #tpu.memory_space<smem>>) -> (i32, i32) {
    %c0_i32 = arith.constant 0 : i32
    %c0_i32_0 = arith.constant 0 : i32
    return %arg0, %c0_i32 : i32, i32
  }
}

</mosaic_0001>

<llo_original>
// kernel: tpu_custom_call.1
$region0: #{tpu_custom_call.1}
  #allocation0 [shape = 'u32[]', space=smem, size = 0x4, offset = 0x4, fixed_abs, tag = 'smem constant byte address 0x4 - core index']
  #allocation1 [shape = 'u32[144,128]{1,0:T(1,128)}', space=vmem, size = 0x12000, scoped, tag = 'internal scratch']
  #allocation2 [shape = 'f32[128,128]{1,0:T(8,128)}', space=vmem, size = 0x10000, scoped, tag = 'scratch operand']
  #allocation3 [shape = 's32[1]{0}', space=sflag, size = 0x4, scoped, tag = 'scoped memory for tpu_custom_call.1']
  #allocation4 [shape = 'u8[512]{0}', space=smem, size = 0x200, scoped, tag = 'prefetched SMEM operand 0']
  #allocation5 [shape = 'u8[512]{0}', space=smem, size = 0x200, scoped, tag = 'prefetched SMEM operand 1']
  %s0 = inlined_call_operand.hbm [shape: s32[2], index: 0, kind: input, shape index: {}]
  %s1 = inlined_call_operand.vmem [shape: s32[2], index: 1, kind: input, shape index: {}]
  %s2 = inlined_call_operand.hbm [shape: bf16[256,256], index: 2, kind: input, shape index: {}]
  %s3 = inlined_call_operand.hbm [shape: bf16[256,128], index: 3, kind: input, shape index: {}]
  %s4 = inlined_call_operand.hbm [shape: bf16[256,128], index: 4, kind: input, shape index: {}]
  %s5 = inlined_call_operand.hbm [shape: bf16[128,128], index: 5, kind: input, shape index: {}]
  %s6 = inlined_call_operand.hbm [shape: bf16[256,128], index: 6, kind: output, shape index: {}]
  %s7 = sld [smem:[#allocation0]]
  $region77: #{tpu_custom_call.1} parent=0
    _
  %s9 = ssub.s32 1, %s7
  %s10 = scalar_select 0, %s9, %s7
  %12 = dma.hbm_to_smem %s0, 16, [#allocation4], [#allocation3]
  %s13 = sshll.u32 %s1, 4
  %s14 = int_to_ptr.vmem [resolvable:$true] %s13
  %16 = dma.vmem_to_smem %s14, 16, [#allocation5], [#allocation3]
  %17 = dma.done [#allocation3], 32
  %18 = sfence
  $region1: #{tpu_custom_call.1} parent=0
    #allocation6 [shape = 'u8[131072]{0}', space=vmem, size = 0x20000, scoped, tag = 'input window, operand 2']
    #allocation7 [shape = 's32[2]{0}', space=sflag, size = 0x8, scoped, tag = 'scoped memory for tpu_custom_call.1']
    #allocation8 [shape = 's32[2]{0}', space=sflag, size = 0x8, scoped, tag = 'scoped memory for tpu_custom_call.1']
    #allocation9 [shape = 'u8[65536]{0}', space=vmem, size = 0x10000, scoped, tag = 'input window, operand 3, single buffered']
    #allocation10 [shape = 's32[1]{0}', space=sflag, size = 0x4, scoped, tag = 'scoped memory for tpu_custom_call.1']
    #allocation11 [shape = 'u8[65536]{0}', space=vmem, size = 0x10000, scoped, tag = 'input window, operand 4']
    #allocation12 [shape = 'u8[32768]{0}', space=vmem, size = 0x8000, scoped, tag = 'input window, operand 5, single buffered']
    #allocation13 [shape = 'u8[65536]{0}', space=vmem, size = 0x10000, scoped, tag = 'output window, operand 0']
    %19 = vsyncpa [#allocation7], 0
    %s20 = scalar_lea.sflag [#allocation7], 1
    %21 = vsyncpa %s20, 0
    %22 = vsyncpa [#allocation10], 0
    %23 = vsyncpa [#allocation8], 0
    %s24 = scalar_lea.sflag [#allocation8], 1
    %25 = vsyncpa %s24, 0
    loop: start=0, step=1, limit=4
    $region2: #{tpu_custom_call.1} parent=1 // loop_pre_header
      _
    $region3: #{tpu_custom_call.1} parent=1 // loop_header
      %s27 = sphi 0, %s31
      %p28 = scmp.ge.s32.totalorder %s27, 4
      %s34 = sphi 0, %s46
      %s35 = sphi 0, %s42
      %s36 = sphi 0, %s34
      %s37 = sphi 0, %s35
      %s38 = sphi 0, %s36
      %s39 = sphi 0, %s37
      %s55 = sphi 0, %s57
      %s58 = sphi 0, %s55
      %s59 = sphi 0, %s58
      %s75 = sphi 0, %s59
      %s79 = sphi 0, %s79
      %s81 = sphi 0, %s79
      %s82 = sphi 0, %s81
      %s96 = sphi 0, %s82
      %s102 = sphi 0, %s104
      %s105 = sphi 0, %s102
      %s106 = sphi 0, %s105
      %s122 = sphi 0, %s106
      %s126 = sphi 0, %s126
      %s128 = sphi 0, %s126
      %s129 = sphi 0, %s128
      %s143 = sphi 0, %s129
      %s149 = sphi 0, %s151
      %s152 = sphi 0, %s149
      %s153 = sphi 0, %s152
      %s169 = sphi 0, %s153
    $region4: #{tpu_custom_call.1} parent=1 // loop_header_branch
      %30 = sbr.rel (%p28) target = $region8
    $region5: #{tpu_custom_call.1} parent=1 // loop_body
      %s32 = ssub.s32 %s27, 1
      %s33 = ssub.s32 %s27, 2
      %s40 = sadd.s32 1, %s35
      %p41 = scmp.ge.s32.totalorder %s40, 1
      %s42 = scalar_select %p41, 0, %s40
      %s43 = sadd.s32 1, %s34
      %s44 = scalar_select %p41, %s43, %s34
      %p45 = scmp.ge.s32.totalorder %s44, 2
      %s46 = scalar_select %p45, 0, %s44
      %s47 = sadd.s32 %s34, %s35
      %s48 = sld [smem:[#allocation4 + %s47]]
      %s49 = sadd.s32 %s46, %s42
      %s50 = sld [smem:[#allocation4 + %s49]]
      %s51 = ssub.s32 %s34, %s46
      %s52 = ssub.s32 %s48, %s50
      %s53 = sor.u32 %s51, %s52
      %p54 = scmp.eq.s32.totalorder %s53, 0
      %s56 = sadd.s32 %s55, 1
      %s57 = scalar_select %p54, %s55, %s56
      %p60 = pneg %p54
      %p61 = scmp.eq.s32.totalorder %s27, 1
      %p62 = por %p60, %p61
      %p63 = scmp.ne.s32.totalorder %s55, %s58
      %p64 = scmp.eq.s32.totalorder %s27, 0
      %p65 = por %p63, %p64
      %p66 = scmp.ne.s32.totalorder %s55, %s58
      %p67 = scmp.eq.s32.totalorder %s32, 1
      %p68 = por %p66, %p67
      %p69 = scmp.ne.s32.totalorder %s58, %s59
      %p70 = scmp.eq.s32.totalorder %s32, 0
      %p71 = por %p69, %p70
      %p72 = scmp.ne.s32.totalorder %s58, %s59
      %p73 = scmp.eq.s32.totalorder %s33, 1
      %p74 = por %p72, %p73
      %p76 = scmp.ne.s32.totalorder %s59, %s75
      %p77 = scmp.eq.s32.totalorder %s33, 0
      %p78 = por %p76, %p77
      %s80 = sadd.s32 %s79, 1
      %p83 = scmp.eq.s32.totalorder %s27, 1
      %p84 = scmp.ne.s32.totalorder %s79, %s81
      %p85 = scmp.eq.s32.totalorder %s27, 0
      %p86 = por %p84, %p85
      %p87 = scmp.ne.s32.totalorder %s79, %s81
      %p88 = scmp.eq.s32.totalorder %s32, 1
      %p89 = por %p87, %p88
      %p90 = scmp.ne.s32.totalorder %s81, %s82
      %p91 = scmp.eq.s32.totalorder %s32, 0
      %p92 = por %p90, %p91
      %p93 = scmp.ne.s32.totalorder %s81, %s82
      %p94 = scmp.eq.s32.totalorder %s33, 1
      %p95 = por %p93, %p94
      %p97 = scmp.ne.s32.totalorder %s82, %s96
      %p98 = scmp.eq.s32.totalorder %s33, 0
      %p99 = por %p97, %p98
      %s100 = ssub.s32 %s34, %s46
      %p101 = scmp.eq.s32.totalorder %s100, 0
      %s103 = sadd.s32 %s102, 1
      %s104 = scalar_select %p101, %s102, %s103
      %p107 = pneg %p101
      %p108 = scmp.eq.s32.totalorder %s27, 1
      %p109 = por %p107, %p108
      %p110 = scmp.ne.s32.totalorder %s102, %s105
      %p111 = scmp.eq.s32.totalorder %s27, 0
      %p112 = por %p110, %p111
      %p113 = scmp.ne.s32.totalorder %s102, %s105
      %p114 = scmp.eq.s32.totalorder %s32, 1
      %p115 = por %p113, %p114
      %p116 = scmp.ne.s32.totalorder %s105, %s106
      %p117 = scmp.eq.s32.totalorder %s32, 0
      %p118 = por %p116, %p117
      %p119 = scmp.ne.s32.totalorder %s105, %s106
      %p120 = scmp.eq.s32.totalorder %s33, 1
      %p121 = por %p119, %p120
      %p123 = scmp.ne.s32.totalorder %s106, %s122
      %p124 = scmp.eq.s32.totalorder %s33, 0
      %p125 = por %p123, %p124
      %s127 = sadd.s32 %s126, 1
      %p130 = scmp.eq.s32.totalorder %s27, 1
      %p131 = scmp.ne.s32.totalorder %s126, %s128
      %p132 = scmp.eq.s32.totalorder %s27, 0
      %p133 = por %p131, %p132
      %p134 = scmp.ne.s32.totalorder %s126, %s128
      %p135 = scmp.eq.s32.totalorder %s32, 1
      %p136 = por %p134, %p135
      %p137 = scmp.ne.s32.totalorder %s128, %s129
      %p138 = scmp.eq.s32.totalorder %s32, 0
      %p139 = por %p137, %p138
      %p140 = scmp.ne.s32.totalorder %s128, %s129
      %p141 = scmp.eq.s32.totalorder %s33, 1
      %p142 = por %p140, %p141
      %p144 = scmp.ne.s32.totalorder %s129, %s143
      %p145 = scmp.eq.s32.totalorder %s33, 0
      %p146 = por %p144, %p145
      %s147 = ssub.s32 %s34, %s46
      %p148 = scmp.eq.s32.totalorder %s147, 0
      %s150 = sadd.s32 %s149, 1
      %s151 = scalar_select %p148, %s149, %s150
      %p154 = pneg %p148
      %p155 = scmp.eq.s32.totalorder %s27, 1
      %p156 = por %p154, %p155
      %p157 = scmp.ne.s32.totalorder %s149, %s152
      %p158 = scmp.eq.s32.totalorder %s27, 0
      %p159 = por %p157, %p158
      %p160 = scmp.ne.s32.totalorder %s149, %s152
      %p161 = scmp.eq.s32.totalorder %s32, 1
      %p162 = por %p160, %p161
      %p163 = scmp.ne.s32.totalorder %s152, %s153
      %p164 = scmp.eq.s32.totalorder %s32, 0
      %p165 = por %p163, %p164
      %p166 = scmp.ne.s32.totalorder %s152, %s153
      %p167 = scmp.eq.s32.totalorder %s33, 1
      %p168 = por %p166, %p167
      %p170 = scmp.ne.s32.totalorder %s153, %s169
      %p171 = scmp.eq.s32.totalorder %s33, 0
      %p172 = por %p170, %p171
      %p173 = scmp.le.s32.totalorder 1, %s27
      %p174 = scmp.lt.s32.totalorder %s27, 3
      %p175 = pnand %p173, %p174
      %p176 = pneg %p175
      // Predicated region
      $region9: #{tpu_custom_call.1} parent=5 // pred_check
        _
      $region10: #{tpu_custom_call.1} parent=5 // pred_check_branch
        %178 = sbr.rel (%p175) target = $region12
      $region11: #{tpu_custom_call.1} parent=5 // pred_region
        %s179 = ssub.s32 %s27, 1
        // Predicated region
        $region13: #{tpu_custom_call.1} parent=11 // pred_check
          %p180 = pneg %p92
        $region14: #{tpu_custom_call.1} parent=11 // pred_check_branch
          %182 = sbr.rel (%p180) target = $region16
        $region15: #{tpu_custom_call.1} parent=11 // pred_region
          %s184 = ssub.s32 2048, 2048
          %185 = vsyncadd [#allocation10], %s184
          %s186 = sshll.u32 [#allocation9], 4
          %s187 = int_to_ptr.vmem [resolvable:$true] %s186
          %192 = dma.hbm_to_vmem [thread:$0]  %s3, 2048, %s187, [#allocation10], 64, 64, 4
        $region16: #{tpu_custom_call.1} parent=11 // pred_fallthru
          _
        // Predicated region
        $region17: #{tpu_custom_call.1} parent=11 // pred_check
          %p193 = pneg %p139
        $region18: #{tpu_custom_call.1} parent=11 // pred_check_branch
          %195 = sbr.rel (%p193) target = $region20
        $region19: #{tpu_custom_call.1} parent=11 // pred_region
          %s197 = ssub.s32 1024, 1024
          %198 = vsyncadd [#allocation10], %s197
          %s199 = sshll.u32 [#allocation12], 4
          %s200 = int_to_ptr.vmem [resolvable:$true] %s199
          %205 = dma.hbm_to_vmem [thread:$0]  %s5, 1024, %s200, [#allocation10], 64, 64, 4
        $region20: #{tpu_custom_call.1} parent=11 // pred_fallthru
          _
      $region12: #{tpu_custom_call.1} parent=5 // pred_fallthru
        _
      %p206 = scmp.lt.s32.totalorder %s27, 2
      // Predicated region
      $region21: #{tpu_custom_call.1} parent=5 // pred_check
        %p207 = pneg %p206
      $region22: #{tpu_custom_call.1} parent=5 // pred_check_branch
        %209 = sbr.rel (%p207) target = $region24
      $region23: #{tpu_custom_call.1} parent=5 // pred_region
        // Predicated region
        $region25: #{tpu_custom_call.1} parent=23 // pred_check
          %p210 = pneg %p65
        $region26: #{tpu_custom_call.1} parent=23 // pred_check_branch
          %212 = sbr.rel (%p210) target = $region28
        $region27: #{tpu_custom_call.1} parent=23 // pred_region
          %s213 = sand.u32 %s27, 1
          %s214 = scalar_lea.sflag [#allocation7], %s213
          %s215 = sand.u32 %s55, 1
          %s216 = smul.addr %s215, 128
          %s217 = scalar_lea.vmem [#allocation6], %s216
          %s218 = sadd.s32 %s34, %s35
          %s219 = sld [smem:[#allocation4 + %s218]]
          %s220 = smul.u32 16, %s34
          %s221 = smul.u32 2, %s219
          %s223 = ssub.s32 2048, 2048
          %224 = vsyncadd %s214, %s223
          %s225 = smul.addr %s220, 2
          %s226 = sadd.s32 %s221, %s225
          %s227 = smul.addr %s226, 64
          %s228 = scalar_lea.hbm %s2, %s227
          %s229 = sshll.u32 %s217, 4
          %s230 = int_to_ptr.vmem [resolvable:$true] %s229
          %235 = dma.hbm_to_vmem [thread:$0]  %s228, 2048, %s230, %s214, 128, 128, 8
        $region28: #{tpu_custom_call.1} parent=23 // pred_fallthru
          _
        // Predicated region
        $region29: #{tpu_custom_call.1} parent=23 // pred_check
          %p236 = pneg %p112
        $region30: #{tpu_custom_call.1} parent=23 // pred_check_branch
          %238 = sbr.rel (%p236) target = $region32
        $region31: #{tpu_custom_call.1} parent=23 // pred_region
          %s239 = sand.u32 %s27, 1
          %s240 = scalar_lea.sflag [#allocation7], %s239
          %s241 = sand.u32 %s102, 1
          %s242 = smul.addr %s241, 64
          %s243 = scalar_lea.vmem [#allocation11], %s242
          %s244 = smul.u32 16, %s34
          %s246 = ssub.s32 1024, 1024
          %247 = vsyncadd %s240, %s246
          %s248 = smul.addr %s244, 64
          %s249 = scalar_lea.hbm %s4, %s248
          %s250 = sshll.u32 %s243, 4
          %s251 = int_to_ptr.vmem [resolvable:$true] %s250
          %256 = dma.hbm_to_vmem [thread:$0]  %s249, 1024, %s251, %s240, 64, 64, 4
        $region32: #{tpu_custom_call.1} parent=23 // pred_fallthru
          _
      $region24: #{tpu_custom_call.1} parent=5 // pred_fallthru
        _
      %p257 = scmp.le.s32.totalorder 1, %s27
      %p258 = scmp.lt.s32.totalorder %s27, 3
      %p259 = pnand %p257, %p258
      %p260 = pneg %p259
      // Predicated region
      $region33: #{tpu_custom_call.1} parent=5 // pred_check
        _
      $region34: #{tpu_custom_call.1} parent=5 // pred_check_branch
        %262 = sbr.rel (%p259) target = $region36
      $region35: #{tpu_custom_call.1} parent=5 // pred_region
        %s263 = ssub.s32 %s27, 1
        %s264 = sand.u32 %s32, 1
        %s265 = scalar_lea.sflag [#allocation7], %s264
        %s266 = sand.u32 %s58, 1
        %s267 = smul.addr %s266, 128
        %s268 = scalar_lea.vmem [#allocation6], %s267
        // Predicated region
        $region37: #{tpu_custom_call.1} parent=35 // pred_check
          %p269 = pneg %p71
        $region38: #{tpu_custom_call.1} parent=35 // pred_check_branch
          %271 = sbr.rel (%p269) target = $region40
        $region39: #{tpu_custom_call.1} parent=35 // pred_region
          %272 = dma.done %s265, 2048
        $region40: #{tpu_custom_call.1} parent=35 // pred_fallthru
          _
        // Predicated region
        $region41: #{tpu_custom_call.1} parent=35 // pred_check
          %p273 = pneg %p92
        $region42: #{tpu_custom_call.1} parent=35 // pred_check_branch
          %275 = sbr.rel (%p273) target = $region44
        $region43: #{tpu_custom_call.1} parent=35 // pred_region
          %276 = dma.done [#allocation10], 2048
        $region44: #{tpu_custom_call.1} parent=35 // pred_fallthru
          _
        %s277 = sand.u32 %s32, 1
        %s278 = scalar_lea.sflag [#allocation7], %s277
        %s279 = sand.u32 %s105, 1
        %s280 = smul.addr %s279, 64
        %s281 = scalar_lea.vmem [#allocation11], %s280
        // Predicated region
        $region45: #{tpu_custom_call.1} parent=35 // pred_check
          %p282 = pneg %p118
        $region46: #{tpu_custom_call.1} parent=35 // pred_check_branch
          %284 = sbr.rel (%p282) target = $region48
        $region47: #{tpu_custom_call.1} parent=35 // pred_region
          %285 = dma.done %s278, 1024
        $region48: #{tpu_custom_call.1} parent=35 // pred_fallthru
          _
        // Predicated region
        $region49: #{tpu_custom_call.1} parent=35 // pred_check
          %p286 = pneg %p139
        $region50: #{tpu_custom_call.1} parent=35 // pred_check_branch
          %288 = sbr.rel (%p286) target = $region52
        $region51: #{tpu_custom_call.1} parent=35 // pred_region
          %289 = dma.done [#allocation10], 1024
        $region52: #{tpu_custom_call.1} parent=35 // pred_fallthru
          _
        %s290 = sand.u32 %s32, 1
        %s291 = scalar_lea.sflag [#allocation7], %s290
        %s292 = sand.u32 %s58, 1
        %s293 = smul.addr %s292, 128
        %s294 = scalar_lea.vmem [#allocation6], %s293
        %p295 = pneg %p71
        %p296 = pneg %p68
        %p297 = pneg %p92
        %p298 = pneg %p89
        %s299 = sand.u32 %s32, 1
        %s300 = scalar_lea.sflag [#allocation7], %s299
        %s301 = sand.u32 %s105, 1
        %s302 = smul.addr %s301, 64
        %s303 = scalar_lea.vmem [#allocation11], %s302
        %p304 = pneg %p118
        %p305 = pneg %p115
        %p306 = pneg %p139
        %p307 = pneg %p136
        %p308 = pneg %p165
        %p309 = pneg %p162
        %s310 = sand.u32 %s152, 1
        %s311 = scalar_lea.sflag [#allocation8], %s310
        %s312 = sand.u32 %s152, 1
        %s313 = smul.addr %s312, 64
        %s314 = scalar_lea.vmem [#allocation13], %s313
        %s315 = sadd.s32 %s36, %s37
        %s316 = sld [smem:[#allocation4 + %s315]]
        %s317 = smul.u32 16, %s36
        %s318 = smul.u32 2, %s316
        %s319 = smul.u32 16, %s36
        %s320 = smul.u32 16, %s36
        %p322 = scmp.eq.s32.totalorder %s37, 0
        // Predicated region
        $region53: #{tpu_custom_call.1} parent=35 // pred_check
          %p323 = pneg %p322
        $region54: #{tpu_custom_call.1} parent=35 // pred_check_branch
          %325 = sbr.rel (%p323) target = $region56
        $region55: #{tpu_custom_call.1} parent=35 // pred_region
          %326 = vst [vmem:[#allocation2] sm:$0xff] 0.0
          %327 = vst [vmem:[#allocation2 + $0x8] sm:$0xff] 0.0
          %328 = vst [vmem:[#allocation2 + $0x10] sm:$0xff] 0.0
          %329 = vst [vmem:[#allocation2 + $0x18] sm:$0xff] 0.0
          %330 = vst [vmem:[#allocation2 + $0x20] sm:$0xff] 0.0
          %331 = vst [vmem:[#allocation2 + $0x28] sm:$0xff] 0.0
          %332 = vst [vmem:[#allocation2 + $0x30] sm:$0xff] 0.0
          %333 = vst [vmem:[#allocation2 + $0x38] sm:$0xff] 0.0
          %334 = vst [vmem:[#allocation2 + $0x40] sm:$0xff] 0.0
          %335 = vst [vmem:[#allocation2 + $0x48] sm:$0xff] 0.0
          %336 = vst [vmem:[#allocation2 + $0x50] sm:$0xff] 0.0
          %337 = vst [vmem:[#allocation2 + $0x58] sm:$0xff] 0.0
          %338 = vst [vmem:[#allocation2 + $0x60] sm:$0xff] 0.0
          %339 = vst [vmem:[#allocation2 + $0x68] sm:$0xff] 0.0
          %340 = vst [vmem:[#allocation2 + $0x70] sm:$0xff] 0.0
          %341 = vst [vmem:[#allocation2 + $0x78] sm:$0xff] 0.0
        $region56: #{tpu_custom_call.1} parent=35 // pred_fallthru
          _
        %s342 = sld [smem:[#allocation5 + %s36]]
        %p343 = scmp.lt.s32.totalorder %s37, %s342
        // Predicated region
        $region57: #{tpu_custom_call.1} parent=35 // pred_check
          %p344 = pneg %p343
        $region58: #{tpu_custom_call.1} parent=35 // pred_check_branch
          %346 = sbr.rel (%p344) target = $region60
        $region59: #{tpu_custom_call.1} parent=35 // pred_region
          %s347 = sadd.s32 %s36, %s37
          %s348 = sld [smem:[#allocation4 + %s347]]
          %s349 = smul.u32 %s348, 256
          %s350 = sshra.s32 %s349, 3
          %s351 = sand.u32 %s349, 7
          %s352 = smul.addr %s350, 4
          %s353 = scalar_lea.vmem [#allocation9], %s352
          %v354 = vld [vmem:[%s353] sm:$0xf]
          %v355 = vld [vmem:[%s353 + $0x4] sm:$0xf]
          %v356 = vld [vmem:[%s353 + $0x8] sm:$0xf]
          %v357 = vld [vmem:[%s353 + $0xc] sm:$0xf]
          %v358 = vld [vmem:[%s353 + $0x10] sm:$0xf]
          %v359 = vld [vmem:[%s353 + $0x14] sm:$0xf]
          %v360 = vld [vmem:[%s353 + $0x18] sm:$0xf]
          %v361 = vld [vmem:[%s353 + $0x1c] sm:$0xf]
          %v362 = vld [vmem:[%s353 + $0x20] sm:$0xf]
          %v363 = vld [vmem:[%s353 + $0x24] sm:$0xf]
          %v364 = vld [vmem:[%s353 + $0x28] sm:$0xf]
          %v365 = vld [vmem:[%s353 + $0x2c] sm:$0xf]
          %v366 = vld [vmem:[%s353 + $0x30] sm:$0xf]
          %v367 = vld [vmem:[%s353 + $0x34] sm:$0xf]
          %v368 = vld [vmem:[%s353 + $0x38] sm:$0xf]
          %v369 = vld [vmem:[%s353 + $0x3c] sm:$0xf]
          %v370 = vld [vmem:[%s353 + $0x40] sm:$0xf]
          %v371 = vld [vmem:[%s353 + $0x44] sm:$0xf]
          %v372 = vld [vmem:[%s353 + $0x48] sm:$0xf]
          %v373 = vld [vmem:[%s353 + $0x4c] sm:$0xf]
          %v374 = vld [vmem:[%s353 + $0x50] sm:$0xf]
          %v375 = vld [vmem:[%s353 + $0x54] sm:$0xf]
          %v376 = vld [vmem:[%s353 + $0x58] sm:$0xf]
          %v377 = vld [vmem:[%s353 + $0x5c] sm:$0xf]
          %v378 = vld [vmem:[%s353 + $0x60] sm:$0xf]
          %v379 = vld [vmem:[%s353 + $0x64] sm:$0xf]
          %v380 = vld [vmem:[%s353 + $0x68] sm:$0xf]
          %v381 = vld [vmem:[%s353 + $0x6c] sm:$0xf]
          %v382 = vld [vmem:[%s353 + $0x70] sm:$0xf]
          %v383 = vld [vmem:[%s353 + $0x74] sm:$0xf]
          %v384 = vld [vmem:[%s353 + $0x78] sm:$0xf]
          %v385 = vld [vmem:[%s353 + $0x7c] sm:$0xf]
          %v386 = vld [vmem:[#allocation2] sm:$0xff]
          %v387 = vld [vmem:[#allocation2 + $0x8] sm:$0xff]
          %v388 = vld [vmem:[#allocation2 + $0x10] sm:$0xff]
          %v389 = vld [vmem:[#allocation2 + $0x18] sm:$0xff]
          %v390 = vld [vmem:[#allocation2 + $0x20] sm:$0xff]
          %v391 = vld [vmem:[#allocation2 + $0x28] sm:$0xff]
          %v392 = vld [vmem:[#allocation2 + $0x30] sm:$0xff]
          %v393 = vld [vmem:[#allocation2 + $0x38] sm:$0xff]
          %v394 = vld [vmem:[#allocation2 + $0x40] sm:$0xff]
          %v395 = vld [vmem:[#allocation2 + $0x48] sm:$0xff]
          %v396 = vld [vmem:[#allocation2 + $0x50] sm:$0xff]
          %v397 = vld [vmem:[#allocation2 + $0x58] sm:$0xff]
          %v398 = vld [vmem:[#allocation2 + $0x60] sm:$0xff]
          %v399 = vld [vmem:[#allocation2 + $0x68] sm:$0xff]
          %v400 = vld [vmem:[#allocation2 + $0x70] sm:$0xff]
          %v401 = vld [vmem:[#allocation2 + $0x78] sm:$0xff]
          %v402 = vld [vmem:[%s268] sm:$0xff]
          %v403 = vld [vmem:[%s268 + $0x8] sm:$0xff]
          %v404 = vld [vmem:[%s268 + $0x10] sm:$0xff]
          %v405 = vld [vmem:[%s268 + $0x18] sm:$0xff]
          %v406 = vld [vmem:[%s268 + $0x20] sm:$0xff]
          %v407 = vld [vmem:[%s268 + $0x28] sm:$0xff]
          %v408 = vld [vmem:[%s268 + $0x30] sm:$0xff]
          %v409 = vld [vmem:[%s268 + $0x38] sm:$0xff]
          %v410 = vld [vmem:[%s268 + $0x40] sm:$0xff]
          %v411 = vld [vmem:[%s268 + $0x48] sm:$0xff]
          %v412 = vld [vmem:[%s268 + $0x50] sm:$0xff]
          %v413 = vld [vmem:[%s268 + $0x58] sm:$0xff]
          %v414 = vld [vmem:[%s268 + $0x60] sm:$0xff]
          %v415 = vld [vmem:[%s268 + $0x68] sm:$0xff]
          %v416 = vld [vmem:[%s268 + $0x70] sm:$0xff]
          %v417 = vld [vmem:[%s268 + $0x78] sm:$0xff]
          %v434 = vunpack.c.l.b16 %v402
          %v435 = vunpack.c.h.b16 %v402
          %v436 = vunpack.c.l.b16 %v403
          %v437 = vunpack.c.h.b16 %v403
          %v438 = vunpack.c.l.b16 %v404
          %v439 = vunpack.c.h.b16 %v404
          %v440 = vunpack.c.l.b16 %v405
          %v441 = vunpack.c.h.b16 %v405
          %v442 = vunpack.c.l.b16 %v406
          %v443 = vunpack.c.h.b16 %v406
          %v444 = vunpack.c.l.b16 %v407
          %v445 = vunpack.c.h.b16 %v407
          %v446 = vunpack.c.l.b16 %v408
          %v447 = vunpack.c.h.b16 %v408
          %v448 = vunpack.c.l.b16 %v409
          %v449 = vunpack.c.h.b16 %v409
          %v450 = vunpack.c.l.b16 %v410
          %v451 = vunpack.c.h.b16 %v410
          %v452 = vunpack.c.l.b16 %v411
          %v453 = vunpack.c.h.b16 %v411
          %v454 = vunpack.c.l.b16 %v412
          %v455 = vunpack.c.h.b16 %v412
          %v456 = vunpack.c.l.b16 %v413
          %v457 = vunpack.c.h.b16 %v413
          %v458 = vunpack.c.l.b16 %v414
          %v459 = vunpack.c.h.b16 %v414
          %v460 = vunpack.c.l.b16 %v415
          %v461 = vunpack.c.h.b16 %v415
          %v462 = vunpack.c.l.b16 %v416
          %v463 = vunpack.c.h.b16 %v416
          %v464 = vunpack.c.l.b16 %v417
          %v465 = vunpack.c.h.b16 %v417
          %v466 = vpack.c.b16 %v436, %v434
          %v467 = vpack.c.b16 %v437, %v435
          %v468 = vpack.c.b16 %v440, %v438
          %v469 = vpack.c.b16 %v441, %v439
          %v470 = vpack.c.b16 %v444, %v442
          %v471 = vpack.c.b16 %v445, %v443
          %v472 = vpack.c.b16 %v448, %v446
          %v473 = vpack.c.b16 %v449, %v447
          %v474 = vpack.c.b16 %v452, %v450
          %v475 = vpack.c.b16 %v453, %v451
          %v476 = vpack.c.b16 %v456, %v454
          %v477 = vpack.c.b16 %v457, %v455
          %v478 = vpack.c.b16 %v460, %v458
          %v479 = vpack.c.b16 %v461, %v459
          %v480 = vpack.c.b16 %v464, %v462
          %v481 = vpack.c.b16 %v465, %v463
          %v530 = vunpack.c.l.b16 %v354
          %v531 = vunpack.c.l.b16 %v355
          %v532 = vunpack.c.l.b16 %v356
          %v533 = vunpack.c.l.b16 %v357
          %v534 = vunpack.c.l.b16 %v358
          %v535 = vunpack.c.l.b16 %v359
          %v536 = vunpack.c.l.b16 %v360
          %v537 = vunpack.c.l.b16 %v361
          %v538 = vunpack.c.l.b16 %v362
          %v539 = vunpack.c.l.b16 %v363
          %v540 = vunpack.c.l.b16 %v364
          %v541 = vunpack.c.l.b16 %v365
          %v542 = vunpack.c.l.b16 %v366
          %v543 = vunpack.c.l.b16 %v367
          %v544 = vunpack.c.l.b16 %v368
          %v545 = vunpack.c.l.b16 %v369
          %v546 = vunpack.c.l.b16 %v370
          %v547 = vunpack.c.l.b16 %v371
          %v548 = vunpack.c.l.b16 %v372
          %v549 = vunpack.c.l.b16 %v373
          %v550 = vunpack.c.l.b16 %v374
          %v551 = vunpack.c.l.b16 %v375
          %v552 = vunpack.c.l.b16 %v376
          %v553 = vunpack.c.l.b16 %v377
          %v554 = vunpack.c.l.b16 %v378
          %v555 = vunpack.c.l.b16 %v379
          %v556 = vunpack.c.l.b16 %v380
          %v557 = vunpack.c.l.b16 %v381
          %v558 = vunpack.c.l.b16 %v382
          %v559 = vunpack.c.l.b16 %v383
          %v560 = vunpack.c.l.b16 %v384
          %v561 = vunpack.c.l.b16 %v385
          %v562 = vpack.c.b16 %v531, %v530
          %v563 = vpack.c.b16 %v533, %v532
          %v564 = vpack.c.b16 %v535, %v534
          %v565 = vpack.c.b16 %v537, %v536
          %v566 = vpack.c.b16 %v539, %v538
          %v567 = vpack.c.b16 %v541, %v540
          %v568 = vpack.c.b16 %v543, %v542
          %v569 = vpack.c.b16 %v545, %v544
          %v570 = vpack.c.b16 %v547, %v546
          %v571 = vpack.c.b16 %v549, %v548
          %v572 = vpack.c.b16 %v551, %v550
          %v573 = vpack.c.b16 %v553, %v552
          %v574 = vpack.c.b16 %v555, %v554
          %v575 = vpack.c.b16 %v557, %v556
          %v576 = vpack.c.b16 %v559, %v558
          %v577 = vpack.c.b16 %v561, %v560
          %594 = vmatprep.subr.bf16.mxu0 0
          %595 = vmatpush1.bf16.msra.mxu0 %v562
          %596 = vmatprep.subr.bf16.mxu0 0
          %597 = vmatpush1.bf16.msra.mxu0 %v563
          %598 = vmatprep.subr.bf16.mxu0 0
          %599 = vmatpush1.bf16.msra.mxu0 %v564
          %600 = vmatprep.subr.bf16.mxu0 0
          %601 = vmatpush1.bf16.msra.mxu0 %v565
          %602 = vmatprep.subr.bf16.mxu0 0
          %603 = vmatpush1.bf16.msra.mxu0 %v566
          %604 = vmatprep.subr.bf16.mxu0 0
          %605 = vmatpush1.bf16.msra.mxu0 %v567
          %606 = vmatprep.subr.bf16.mxu0 0
          %607 = vmatpush1.bf16.msra.mxu0 %v568
          %608 = vmatprep.subr.bf16.mxu0 0
          %609 = vmatpush1.bf16.msra.mxu0 %v569
          %610 = vmatprep.subr.bf16.mxu0 0
          %611 = vmatpush1.bf16.msra.mxu0 %v570
          %612 = vmatprep.subr.bf16.mxu0 0
          %613 = vmatpush1.bf16.msra.mxu0 %v571
          %614 = vmatprep.subr.bf16.mxu0 0
          %615 = vmatpush1.bf16.msra.mxu0 %v572
          %616 = vmatprep.subr.bf16.mxu0 0
          %617 = vmatpush1.bf16.msra.mxu0 %v573
          %618 = vmatprep.subr.bf16.mxu0 0
          %619 = vmatpush1.bf16.msra.mxu0 %v574
          %620 = vmatprep.subr.bf16.mxu0 0
          %621 = vmatpush1.bf16.msra.mxu0 %v575
          %622 = vmatprep.subr.bf16.mxu0 0
          %623 = vmatpush1.bf16.msra.mxu0 %v576
          %624 = vmatprep.subr.bf16.mxu0 0
          %625 = vmatpush1.bf16.msra.mxu0 %v577
          %626 = vmatprep.mubr.bf16.mxu0 %v467
          %627 = vmatmul.mubr.bf16.gmra.mrb[0].mxu0 %v466
          %v628 = vpop.f32.mrb[0].mxu0
          %v629 = vadd.f32 0.0, %v628
          %v630 = vpop.f32.mrb[0].mxu0
          %v631 = vpop.f32.mrb[0].mxu0
          %v632 = vadd.f32 0.0, %v631
          %v633 = vpop.f32.mrb[0].mxu0
          %634 = vmatprep.mubr.bf16.mxu0 %v469
          %635 = vmatmul.mubr.bf16.gmra.mrb[0].mxu0 %v468
          %v636 = vpop.f32.mrb[0].mxu0
          %v637 = vadd.f32 0.0, %v636
          %v638 = vpop.f32.mrb[0].mxu0
          %v639 = vpop.f32.mrb[0].mxu0
          %v640 = vadd.f32 0.0, %v639
          %v641 = vpop.f32.mrb[0].mxu0
          %642 = vmatprep.mubr.bf16.mxu0 %v471
          %643 = vmatmul.mubr.bf16.gmra.mrb[0].mxu0 %v470
          %v644 = vpop.f32.mrb[0].mxu0
          %v645 = vadd.f32 0.0, %v644
          %v646 = vpop.f32.mrb[0].mxu0
          %v647 = vpop.f32.mrb[0].mxu0
          %v648 = vadd.f32 0.0, %v647
          %v649 = vpop.f32.mrb[0].mxu0
          %650 = vmatprep.mubr.bf16.mxu0 %v473
          %651 = vmatmul.mubr.bf16.gmra.mrb[0].mxu0 %v472
          %v652 = vpop.f32.mrb[0].mxu0
          %v653 = vadd.f32 0.0, %v652
          %v654 = vpop.f32.mrb[0].mxu0
          %v655 = vpop.f32.mrb[0].mxu0
          %v656 = vadd.f32 0.0, %v655
          %v657 = vpop.f32.mrb[0].mxu0
          %658 = vmatprep.mubr.bf16.mxu0 %v475
          %659 = vmatmul.mubr.bf16.gmra.mrb[0].mxu0 %v474
          %v660 = vpop.f32.mrb[0].mxu0
          %v661 = vadd.f32 0.0, %v660
          %v662 = vpop.f32.mrb[0].mxu0
          %v663 = vpop.f32.mrb[0].mxu0
          %v664 = vadd.f32 0.0, %v663
          %v665 = vpop.f32.mrb[0].mxu0
          %666 = vmatprep.mubr.bf16.mxu0 %v477
          %667 = vmatmul.mubr.bf16.gmra.mrb[0].mxu0 %v476
          %v668 = vpop.f32.mrb[0].mxu0
          %v669 = vadd.f32 0.0, %v668
          %v670 = vpop.f32.mrb[0].mxu0
          %v671 = vpop.f32.mrb[0].mxu0
          %v672 = vadd.f32 0.0, %v671
          %v673 = vpop.f32.mrb[0].mxu0
          %674 = vmatprep.mubr.bf16.mxu0 %v479
          %675 = vmatmul.mubr.bf16.gmra.mrb[0].mxu0 %v478
          %v676 = vpop.f32.mrb[0].mxu0
          %v677 = vadd.f32 0.0, %v676
          %v678 = vpop.f32.mrb[0].mxu0
          %v679 = vpop.f32.mrb[0].mxu0
          %v680 = vadd.f32 0.0, %v679
          %v681 = vpop.f32.mrb[0].mxu0
          %682 = vmatprep.mubr.bf16.mxu0 %v481
          %683 = vmatmul.mubr.bf16.gmra.mrb[0].mxu0 %v480
          %v684 = vpop.f32.mrb[0].mxu0
          %v685 = vadd.f32 0.0, %v684
          %v686 = vpop.f32.mrb[0].mxu0
          %v687 = vpop.f32.mrb[0].mxu0
          %v688 = vadd.f32 0.0, %v687
          %v689 = vpop.f32.mrb[0].mxu0
          %690 = vdwg.mxu0
          %v691 = vadd.f32 %v386, %v629
          %v692 = vadd.f32 %v387, %v632
          %v693 = vadd.f32 %v388, %v637
          %v694 = vadd.f32 %v389, %v640
          %v695 = vadd.f32 %v390, %v645
          %v696 = vadd.f32 %v391, %v648
          %v697 = vadd.f32 %v392, %v653
          %v698 = vadd.f32 %v393, %v656
          %v699 = vadd.f32 %v394, %v661
          %v700 = vadd.f32 %v395, %v664
          %v701 = vadd.f32 %v396, %v669
          %v702 = vadd.f32 %v397, %v672
          %v703 = vadd.f32 %v398, %v677
          %v704 = vadd.f32 %v399, %v680
          %v705 = vadd.f32 %v400, %v685
          %v706 = vadd.f32 %v401, %v688
          %707 = vst [vmem:[#allocation2] sm:$0xff] %v691
          %708 = vst [vmem:[#allocation2 + $0x8] sm:$0xff] %v692
          %709 = vst [vmem:[#allocation2 + $0x10] sm:$0xff] %v693
          %710 = vst [vmem:[#allocation2 + $0x18] sm:$0xff] %v694
          %711 = vst [vmem:[#allocation2 + $0x20] sm:$0xff] %v695
          %712 = vst [vmem:[#allocation2 + $0x28] sm:$0xff] %v696
          %713 = vst [vmem:[#allocation2 + $0x30] sm:$0xff] %v697
          %714 = vst [vmem:[#allocation2 + $0x38] sm:$0xff] %v698
          %715 = vst [vmem:[#allocation2 + $0x40] sm:$0xff] %v699
          %716 = vst [vmem:[#allocation2 + $0x48] sm:$0xff] %v700
          %717 = vst [vmem:[#allocation2 + $0x50] sm:$0xff] %v701
          %718 = vst [vmem:[#allocation2 + $0x58] sm:$0xff] %v702
          %719 = vst [vmem:[#allocation2 + $0x60] sm:$0xff] %v703
          %720 = vst [vmem:[#allocation2 + $0x68] sm:$0xff] %v704
          %721 = vst [vmem:[#allocation2 + $0x70] sm:$0xff] %v705
          %722 = vst [vmem:[#allocation2 + $0x78] sm:$0xff] %v706
        $region60: #{tpu_custom_call.1} parent=35 // pred_fallthru
          _
        // Predicated region
        $region61: #{tpu_custom_call.1} parent=35 // pred_check
          %p723 = pneg %p322
        $region62: #{tpu_custom_call.1} parent=35 // pred_check_branch
          %725 = sbr.rel (%p723) target = $region64
        $region63: #{tpu_custom_call.1} parent=35 // pred_region
          %v726 = vld [vmem:[#allocation2] sm:$0xff]
          %v727 = vld [vmem:[#allocation2 + $0x8] sm:$0xff]
          %v728 = vld [vmem:[#allocation2 + $0x10] sm:$0xff]
          %v729 = vld [vmem:[#allocation2 + $0x18] sm:$0xff]
          %v730 = vld [vmem:[#allocation2 + $0x20] sm:$0xff]
          %v731 = vld [vmem:[#allocation2 + $0x28] sm:$0xff]
          %v732 = vld [vmem:[#allocation2 + $0x30] sm:$0xff]
          %v733 = vld [vmem:[#allocation2 + $0x38] sm:$0xff]
          %v734 = vld [vmem:[#allocation2 + $0x40] sm:$0xff]
          %v735 = vld [vmem:[#allocation2 + $0x48] sm:$0xff]
          %v736 = vld [vmem:[#allocation2 + $0x50] sm:$0xff]
          %v737 = vld [vmem:[#allocation2 + $0x58] sm:$0xff]
          %v738 = vld [vmem:[#allocation2 + $0x60] sm:$0xff]
          %v739 = vld [vmem:[#allocation2 + $0x68] sm:$0xff]
          %v740 = vld [vmem:[#allocation2 + $0x70] sm:$0xff]
          %v741 = vld [vmem:[#allocation2 + $0x78] sm:$0xff]
          %v742 = vpack.c.bf16 %v727, %v726
          %v743 = vpack.c.bf16 %v729, %v728
          %v744 = vpack.c.bf16 %v731, %v730
          %v745 = vpack.c.bf16 %v733, %v732
          %v746 = vpack.c.bf16 %v735, %v734
          %v747 = vpack.c.bf16 %v737, %v736
          %v748 = vpack.c.bf16 %v739, %v738
          %v749 = vpack.c.bf16 %v741, %v740
          %v750 = vld [vmem:[#allocation12] sm:$0xf]
          %v751 = vld [vmem:[#allocation12 + $0x4] sm:$0xf]
          %v752 = vld [vmem:[#allocation12 + $0x8] sm:$0xf]
          %v753 = vld [vmem:[#allocation12 + $0xc] sm:$0xf]
          %v754 = vld [vmem:[#allocation12 + $0x10] sm:$0xf]
          %v755 = vld [vmem:[#allocation12 + $0x14] sm:$0xf]
          %v756 = vld [vmem:[#allocation12 + $0x18] sm:$0xf]
          %v757 = vld [vmem:[#allocation12 + $0x1c] sm:$0xf]
          %v758 = vld [vmem:[#allocation12 + $0x20] sm:$0xf]
          %v759 = vld [vmem:[#allocation12 + $0x24] sm:$0xf]
          %v760 = vld [vmem:[#allocation12 + $0x28] sm:$0xf]
          %v761 = vld [vmem:[#allocation12 + $0x2c] sm:$0xf]
          %v762 = vld [vmem:[#allocation12 + $0x30] sm:$0xf]
          %v763 = vld [vmem:[#allocation12 + $0x34] sm:$0xf]
          %v764 = vld [vmem:[#allocation12 + $0x38] sm:$0xf]
          %v765 = vld [vmem:[#allocation12 + $0x3c] sm:$0xf]
          %v766 = vld [vmem:[%s281] sm:$0xf]
          %v767 = vld [vmem:[%s281 + $0x4] sm:$0xf]
          %v768 = vld [vmem:[%s281 + $0x8] sm:$0xf]
          %v769 = vld [vmem:[%s281 + $0xc] sm:$0xf]
          %v770 = vld [vmem:[%s281 + $0x10] sm:$0xf]
          %v771 = vld [vmem:[%s281 + $0x14] sm:$0xf]
          %v772 = vld [vmem:[%s281 + $0x18] sm:$0xf]
          %v773 = vld [vmem:[%s281 + $0x1c] sm:$0xf]
          %v774 = vld [vmem:[%s281 + $0x20] sm:$0xf]
          %v775 = vld [vmem:[%s281 + $0x24] sm:$0xf]
          %v776 = vld [vmem:[%s281 + $0x28] sm:$0xf]
          %v777 = vld [vmem:[%s281 + $0x2c] sm:$0xf]
          %v778 = vld [vmem:[%s281 + $0x30] sm:$0xf]
          %v779 = vld [vmem:[%s281 + $0x34] sm:$0xf]
          %v780 = vld [vmem:[%s281 + $0x38] sm:$0xf]
          %v781 = vld [vmem:[%s281 + $0x3c] sm:$0xf]
          %v782 = vunpack.c.l.bf16 %v766
          %v783 = vunpack.c.l.bf16 %v767
          %v784 = vunpack.c.l.bf16 %v768
          %v785 = vunpack.c.l.bf16 %v769
          %v786 = vunpack.c.l.bf16 %v770
          %v787 = vunpack.c.l.bf16 %v771
          %v788 = vunpack.c.l.bf16 %v772
          %v789 = vunpack.c.l.bf16 %v773
          %v790 = vunpack.c.l.bf16 %v774
          %v791 = vunpack.c.l.bf16 %v775
          %v792 = vunpack.c.l.bf16 %v776
          %v793 = vunpack.c.l.bf16 %v777
          %v794 = vunpack.c.l.bf16 %v778
          %v795 = vunpack.c.l.bf16 %v779
          %v796 = vunpack.c.l.bf16 %v780
          %v797 = vunpack.c.l.bf16 %v781
          %v814 = vunpack.c.l.b16 %v750
          %v815 = vunpack.c.l.b16 %v751
          %v816 = vunpack.c.l.b16 %v752
          %v817 = vunpack.c.l.b16 %v753
          %v818 = vunpack.c.l.b16 %v754
          %v819 = vunpack.c.l.b16 %v755
          %v820 = vunpack.c.l.b16 %v756
          %v821 = vunpack.c.l.b16 %v757
          %v822 = vunpack.c.l.b16 %v758
          %v823 = vunpack.c.l.b16 %v759
          %v824 = vunpack.c.l.b16 %v760
          %v825 = vunpack.c.l.b16 %v761
          %v826 = vunpack.c.l.b16 %v762
          %v827 = vunpack.c.l.b16 %v763
          %v828 = vunpack.c.l.b16 %v764
          %v829 = vunpack.c.l.b16 %v765
          %v830 = vpack.c.b16 %v815, %v814
          %v831 = vpack.c.b16 %v817, %v816
          %v832 = vpack.c.b16 %v819, %v818
          %v833 = vpack.c.b16 %v821, %v820
          %v834 = vpack.c.b16 %v823, %v822
          %v835 = vpack.c.b16 %v825, %v824
          %v836 = vpack.c.b16 %v827, %v826
          %v837 = vpack.c.b16 %v829, %v828
          %846 = vmatprep.subr.bf16.mxu0 0
          %847 = vmatpush1.bf16.msra.mxu0 %v830
          %848 = vmatprep.subr.bf16.mxu0 0
          %849 = vmatpush1.bf16.msra.mxu0 %v831
          %850 = vmatprep.subr.bf16.mxu0 0
          %851 = vmatpush1.bf16.msra.mxu0 %v832
          %852 = vmatprep.subr.bf16.mxu0 0
          %853 = vmatpush1.bf16.msra.mxu0 %v833
          %854 = vmatprep.subr.bf16.mxu0 0
          %855 = vmatpush1.bf16.msra.mxu0 %v834
          %856 = vmatprep.subr.bf16.mxu0 0
          %857 = vmatpush1.bf16.msra.mxu0 %v835
          %858 = vmatprep.subr.bf16.mxu0 0
          %859 = vmatpush1.bf16.msra.mxu0 %v836
          %860 = vmatprep.subr.bf16.mxu0 0
          %861 = vmatpush1.bf16.msra.mxu0 %v837
          %862 = vmatprep.subr.bf16.mxu0 0
          %863 = vmatpush1.bf16.msra.mxu0 0
          %864 = vmatprep.subr.bf16.mxu0 0
          %865 = vmatpush1.bf16.msra.mxu0 0
          %866 = vmatprep.subr.bf16.mxu0 0
          %867 = vmatpush1.bf16.msra.mxu0 0
          %868 = vmatprep.subr.bf16.mxu0 0
          %869 = vmatpush1.bf16.msra.mxu0 0
          %870 = vmatprep.subr.bf16.mxu0 0
          %871 = vmatpush1.bf16.msra.mxu0 0
          %872 = vmatprep.subr.bf16.mxu0 0
          %873 = vmatpush1.bf16.msra.mxu0 0
          %874 = vmatprep.subr.bf16.mxu0 0
          %875 = vmatpush1.bf16.msra.mxu0 0
          %876 = vmatprep.subr.bf16.mxu0 0
          %877 = vmatpush1.bf16.msra.mxu0 0
          %878 = vmatprep.mubr.bf16.mxu0 0
          %879 = vmatmul.mubr.bf16.gmra.mrb[0].mxu0 %v742
          %v880 = vpop.f32.mrb[0].mxu0
          %v881 = vadd.f32 %v782, %v880
          %v882 = vpop.f32.mrb[0].mxu0
          %v883 = vpop.f32.mrb[0].mxu0
          %v884 = vadd.f32 %v783, %v883
          %v885 = vpop.f32.mrb[0].mxu0
          %886 = vmatprep.mubr.bf16.mxu0 0
          %887 = vmatmul.mubr.bf16.gmra.mrb[0].mxu0 %v743
          %v888 = vpop.f32.mrb[0].mxu0
          %v889 = vadd.f32 %v784, %v888
          %v890 = vpop.f32.mrb[0].mxu0
          %v891 = vpop.f32.mrb[0].mxu0
          %v892 = vadd.f32 %v785, %v891
          %v893 = vpop.f32.mrb[0].mxu0
          %894 = vmatprep.mubr.bf16.mxu0 0
          %895 = vmatmul.mubr.bf16.gmra.mrb[0].mxu0 %v744
          %v896 = vpop.f32.mrb[0].mxu0
          %v897 = vadd.f32 %v786, %v896
          %v898 = vpop.f32.mrb[0].mxu0
          %v899 = vpop.f32.mrb[0].mxu0
          %v900 = vadd.f32 %v787, %v899
          %v901 = vpop.f32.mrb[0].mxu0
          %902 = vmatprep.mubr.bf16.mxu0 0
          %903 = vmatmul.mubr.bf16.gmra.mrb[0].mxu0 %v745
          %v904 = vpop.f32.mrb[0].mxu0
          %v905 = vadd.f32 %v788, %v904
          %v906 = vpop.f32.mrb[0].mxu0
          %v907 = vpop.f32.mrb[0].mxu0
          %v908 = vadd.f32 %v789, %v907
          %v909 = vpop.f32.mrb[0].mxu0
          %910 = vmatprep.mubr.bf16.mxu0 0
          %911 = vmatmul.mubr.bf16.gmra.mrb[0].mxu0 %v746
          %v912 = vpop.f32.mrb[0].mxu0
          %v913 = vadd.f32 %v790, %v912
          %v914 = vpop.f32.mrb[0].mxu0
          %v915 = vpop.f32.mrb[0].mxu0
          %v916 = vadd.f32 %v791, %v915
          %v917 = vpop.f32.mrb[0].mxu0
          %918 = vmatprep.mubr.bf16.mxu0 0
          %919 = vmatmul.mubr.bf16.gmra.mrb[0].mxu0 %v747
          %v920 = vpop.f32.mrb[0].mxu0
          %v921 = vadd.f32 %v792, %v920
          %v922 = vpop.f32.mrb[0].mxu0
          %v923 = vpop.f32.mrb[0].mxu0
          %v924 = vadd.f32 %v793, %v923
          %v925 = vpop.f32.mrb[0].mxu0
          %926 = vmatprep.mubr.bf16.mxu0 0
          %927 = vmatmul.mubr.bf16.gmra.mrb[0].mxu0 %v748
          %v928 = vpop.f32.mrb[0].mxu0
          %v929 = vadd.f32 %v794, %v928
          %v930 = vpop.f32.mrb[0].mxu0
          %v931 = vpop.f32.mrb[0].mxu0
          %v932 = vadd.f32 %v795, %v931
          %v933 = vpop.f32.mrb[0].mxu0
          %934 = vmatprep.mubr.bf16.mxu0 0
          %935 = vmatmul.mubr.bf16.gmra.mrb[0].mxu0 %v749
          %v936 = vpop.f32.mrb[0].mxu0
          %v937 = vadd.f32 %v796, %v936
          %v938 = vpop.f32.mrb[0].mxu0
          %v939 = vpop.f32.mrb[0].mxu0
          %v940 = vadd.f32 %v797, %v939
          %v941 = vpop.f32.mrb[0].mxu0
          %942 = vdwg.mxu0
          %v943 = vmax.f32 %v881, 0.0
          %v944 = vmax.f32 %v884, 0.0
          %v945 = vmax.f32 %v889, 0.0
          %v946 = vmax.f32 %v892, 0.0
          %v947 = vmax.f32 %v897, 0.0
          %v948 = vmax.f32 %v900, 0.0
          %v949 = vmax.f32 %v905, 0.0
          %v950 = vmax.f32 %v908, 0.0
          %v951 = vmax.f32 %v913, 0.0
          %v952 = vmax.f32 %v916, 0.0
          %v953 = vmax.f32 %v921, 0.0
          %v954 = vmax.f32 %v924, 0.0
          %v955 = vmax.f32 %v929, 0.0
          %v956 = vmax.f32 %v932, 0.0
          %v957 = vmax.f32 %v937, 0.0
          %v958 = vmax.f32 %v940, 0.0
          %v959 = vpack.c.bf16 %v944, %v943
          %v960 = vpack.c.bf16 %v946, %v945
          %v961 = vpack.c.bf16 %v948, %v947
          %v962 = vpack.c.bf16 %v950, %v949
          %v963 = vpack.c.bf16 %v952, %v951
          %v964 = vpack.c.bf16 %v954, %v953
          %v965 = vpack.c.bf16 %v956, %v955
          %v966 = vpack.c.bf16 %v958, %v957
          %v975 = vunpack.c.l.b16 %v959
          %v976 = vunpack.c.h.b16 %v959
          %v977 = vunpack.c.l.b16 %v960
          %v978 = vunpack.c.h.b16 %v960
          %v979 = vunpack.c.l.b16 %v961
          %v980 = vunpack.c.h.b16 %v961
          %v981 = vunpack.c.l.b16 %v962
          %v982 = vunpack.c.h.b16 %v962
          %v983 = vunpack.c.l.b16 %v963
          %v984 = vunpack.c.h.b16 %v963
          %v985 = vunpack.c.l.b16 %v964
          %v986 = vunpack.c.h.b16 %v964
          %v987 = vunpack.c.l.b16 %v965
          %v988 = vunpack.c.h.b16 %v965
          %v989 = vunpack.c.l.b16 %v966
          %v990 = vunpack.c.h.b16 %v966
          %v991 = vpack.c.b16 %v975, %v975
          %v992 = vpack.c.b16 %v976, %v976
          %v993 = vpack.c.b16 %v977, %v977
          %v994 = vpack.c.b16 %v978, %v978
          %v995 = vpack.c.b16 %v979, %v979
          %v996 = vpack.c.b16 %v980, %v980
          %v997 = vpack.c.b16 %v981, %v981
          %v998 = vpack.c.b16 %v982, %v982
          %v999 = vpack.c.b16 %v983, %v983
          %v1000 = vpack.c.b16 %v984, %v984
          %v1001 = vpack.c.b16 %v985, %v985
          %v1002 = vpack.c.b16 %v986, %v986
          %v1003 = vpack.c.b16 %v987, %v987
          %v1004 = vpack.c.b16 %v988, %v988
          %v1005 = vpack.c.b16 %v989, %v989
          %v1006 = vpack.c.b16 %v990, %v990
          %1023 = vst [vmem:[%s314] sm:$0xf] %v991
          %1024 = vst [vmem:[%s314 + $0x4] sm:$0xf] %v992
          %1025 = vst [vmem:[%s314 + $0x8] sm:$0xf] %v993
          %1026 = vst [vmem:[%s314 + $0xc] sm:$0xf] %v994
          %1027 = vst [vmem:[%s314 + $0x10] sm:$0xf] %v995
          %1028 = vst [vmem:[%s314 + $0x14] sm:$0xf] %v996
          %1029 = vst [vmem:[%s314 + $0x18] sm:$0xf] %v997
          %1030 = vst [vmem:[%s314 + $0x1c] sm:$0xf] %v998
          %1031 = vst [vmem:[%s314 + $0x20] sm:$0xf] %v999
          %1032 = vst [vmem:[%s314 + $0x24] sm:$0xf] %v1000
          %1033 = vst [vmem:[%s314 + $0x28] sm:$0xf] %v1001
          %1034 = vst [vmem:[%s314 + $0x2c] sm:$0xf] %v1002
          %1035 = vst [vmem:[%s314 + $0x30] sm:$0xf] %v1003
          %1036 = vst [vmem:[%s314 + $0x34] sm:$0xf] %v1004
          %1037 = vst [vmem:[%s314 + $0x38] sm:$0xf] %v1005
          %1038 = vst [vmem:[%s314 + $0x3c] sm:$0xf] %v1006
        $region64: #{tpu_custom_call.1} parent=35 // pred_fallthru
          _
        %s1039 = sand.u32 %s152, 1
        %s1040 = scalar_lea.sflag [#allocation8], %s1039
        %s1041 = sand.u32 %s152, 1
        %s1042 = smul.addr %s1041, 64
        %s1043 = scalar_lea.vmem [#allocation13], %s1042
        // Predicated region
        $region65: #{tpu_custom_call.1} parent=35 // pred_check
          %p1044 = pneg %p162
        $region66: #{tpu_custom_call.1} parent=35 // pred_check_branch
          %1046 = sbr.rel (%p1044) target = $region68
        $region67: #{tpu_custom_call.1} parent=35 // pred_region
          %s1047 = smul.u32 16, %s36
          %s1049 = ssub.s32 1024, 1024
          %1050 = vsyncadd %s1040, %s1049
          %s1051 = smul.addr %s1047, 64
          %s1052 = scalar_lea.hbm %s6, %s1051
          %s1053 = sshll.u32 %s1043, 4
          %s1054 = int_to_ptr.vmem [resolvable:$true] %s1053
          %1059 = dma.vmem_to_hbm [thread:$0]  %s1054, 1024, %s1052, %s1040, 64, 64, 4
        $region68: #{tpu_custom_call.1} parent=35 // pred_fallthru
          _
      $region36: #{tpu_custom_call.1} parent=5 // pred_fallthru
        _
      %p1060 = scmp.le.s32.totalorder 2, %s27
      // Predicated region
      $region69: #{tpu_custom_call.1} parent=5 // pred_check
        %p1061 = pneg %p1060
      $region70: #{tpu_custom_call.1} parent=5 // pred_check_branch
        %1063 = sbr.rel (%p1061) target = $region72
      $region71: #{tpu_custom_call.1} parent=5 // pred_region
        %s1064 = ssub.s32 %s27, 2
        // Predicated region
        $region73: #{tpu_custom_call.1} parent=71 // pred_check
          %p1065 = pneg %p168
        $region74: #{tpu_custom_call.1} parent=71 // pred_check_branch
          %1067 = sbr.rel (%p1065) target = $region76
        $region75: #{tpu_custom_call.1} parent=71 // pred_region
          %s1068 = sand.u32 %s153, 1
          %s1069 = scalar_lea.sflag [#allocation8], %s1068
          %s1070 = sand.u32 %s153, 1
          %s1071 = smul.addr %s1070, 64
          %s1072 = scalar_lea.vmem [#allocation13], %s1071
          %1073 = dma.done %s1069, 1024
        $region76: #{tpu_custom_call.1} parent=71 // pred_fallthru
          _
      $region72: #{tpu_custom_call.1} parent=5 // pred_fallthru
        _
    $region6: #{tpu_custom_call.1} parent=1 // loop_footer
      %s31 = sadd.s32 1, %s27
    $region7: #{tpu_custom_call.1} parent=1 // loop_footer_branch
      %26 = sbr.rel target = $region3
    $region8: #{tpu_custom_call.1} parent=1 // loop_exit
      _
    %1074 = vsyncpa [#allocation7], 1
    %s1075 = scalar_lea.sflag [#allocation7], 1
    %1076 = vsyncpa %s1075, 1
    %1077 = vsyncpa [#allocation10], 1
    %1078 = vsyncpa [#allocation8], 1
    %s1079 = scalar_lea.sflag [#allocation8], 1
    %1080 = vsyncpa %s1079, 1

</llo_original>
